<compile_context>
chip_gen: v7x
topology: tpu7x:2x2x1
jax: 0.10.0
libtpu: 0.0.40
codegen_flags: <defaults>
</compile_context>

<pallas_src>
import jax
import jax.numpy as jnp
from jax.experimental import pallas as pl
from jax.experimental.pallas import tpu as pltpu


_XLA_COPY_MAX_BYTES = 256 * 1024      # below this, plain jnp.copy wins on launch overhead
_MIN_BYTES_PER_DMA = 512 * 1024       # keep each DMA descriptor substantial
_MAX_DMA_CHUNKS = 8                   # max concurrent descriptors in flight


# ---------------------------------------------------------------------------
# Kernels
# ---------------------------------------------------------------------------

def _single_dma_clone_kernel(h_hbm_ref, o_hbm_ref, sem):
    # One HBM->HBM DMA descriptor: no VMEM round trip, no tiling.
    cp = pltpu.make_async_copy(h_hbm_ref, o_hbm_ref, sem)
    cp.start()
    cp.wait()


def _make_chunked_clone_kernel(chunk_starts, chunk_sizes):
    """HBM->HBM clone with len(chunk_starts) concurrent DMA descriptors.

    Chunk boundaries are static Python ints (leading-dim slices), so the
    `.at[pl.ds(...)]` views cost nothing at runtime.
    """

    def kernel(h_hbm_ref, o_hbm_ref, sems):
        copies = []
        for i, (start, size) in enumerate(zip(chunk_starts, chunk_sizes)):
            cp = pltpu.make_async_copy(
                h_hbm_ref.at[pl.ds(start, size)],
                o_hbm_ref.at[pl.ds(start, size)],
                sems.at[i],
            )
            cp.start()          # issue; keep all descriptors in flight
            copies.append(cp)
        for cp in copies:       # drain
            cp.wait()

    return kernel


# ---------------------------------------------------------------------------
# Wrapper
# ---------------------------------------------------------------------------

def _clone_via_dma(x):
    """Whole-array clone as chunked (or single) HBM->HBM async DMA copies."""
    total_bytes = x.size * x.dtype.itemsize

    # Decide the (static) number of concurrent DMA descriptors.
    leading = x.shape[0] if x.ndim >= 1 else 1
    if x.ndim >= 1 and leading > 1 and total_bytes >= 2 * _MIN_BYTES_PER_DMA:
        k = min(_MAX_DMA_CHUNKS, leading,
                max(1, total_bytes // _MIN_BYTES_PER_DMA))
    else:
        k = 1

    cost = pl.CostEstimate(flops=0, transcendentals=0,
                           bytes_accessed=2 * total_bytes)

    if k == 1:
        return pl.pallas_call(
            _single_dma_clone_kernel,
            out_shape=jax.ShapeDtypeStruct(x.shape, x.dtype),
            in_specs=[pl.BlockSpec(memory_space=pl.ANY)],
            out_specs=pl.BlockSpec(memory_space=pl.ANY),
            scratch_shapes=[pltpu.SemaphoreType.DMA(())],
            cost_estimate=cost,
        )(x)

    # Near-equal static split of the leading dim into k chunks.
    base, rem = divmod(leading, k)
    starts, sizes, off = [], [], 0
    for i in range(k):
        sz = base + (1 if i < rem else 0)
        starts.append(off)
        sizes.append(sz)
        off += sz

    kernel = _make_chunked_clone_kernel(tuple(starts), tuple(sizes))

    return pl.pallas_call(
        kernel,
        out_shape=jax.ShapeDtypeStruct(x.shape, x.dtype),
        in_specs=[pl.BlockSpec(memory_space=pl.ANY)],
        out_specs=pl.BlockSpec(memory_space=pl.ANY),
        scratch_shapes=[pltpu.SemaphoreType.DMA((k,))],
        cost_estimate=cost,
    )(x)


def noop_transformer_layer(hidden_states,
                           attention_mask=None,
                           encoder_output=None,
                           enc_dec_attn_mask=None,
                           inference_params=None,
                           *,
                           min_pallas_bytes=_XLA_COPY_MAX_BYTES):
    """Pallas equivalent of NoopTransformerLayer.forward -> hidden_states.clone().

    attention_mask / encoder_output / enc_dec_attn_mask / inference_params are
    accepted for signature parity and ignored, exactly like the PyTorch module.
    For tensors smaller than `min_pallas_bytes` a plain XLA copy is returned
    (custom-call launch overhead dominates there); set min_pallas_bytes=0 to
    force the Pallas DMA path.
    """
    total_bytes = hidden_states.size * hidden_states.dtype.itemsize
    if total_bytes < min_pallas_bytes:
        return jnp.copy(hidden_states)
    return _clone_via_dma(hidden_states)


# ---------------------------------------------------------------------------
# Self-test
# ---------------------------------------------------------------------------

if __name__ == "__main__":
    key = jax.random.PRNGKey(0)
    k1, k2, k3 = jax.random.split(key, 3)

    # Small shape implied by the module: [seq, batch, hidden] (Megatron GPT).
    seq, batch, hidden = 8, 2, 32
    hs_small = jax.random.normal(k1, (seq, batch, hidden), dtype=jnp.float32)
    attention_mask = jnp.ones((batch, 1, seq, seq), dtype=jnp.bool_)

    # 1) Production default for tiny tensors: plain XLA copy.
    out_small = jax.block_until_ready(
        noop_transformer_layer(hs_small, attention_mask))
    assert out_small.shape == hs_small.shape
    assert out_small.dtype == hs_small.dtype
    assert bool(jnp.array_equal(out_small, hs_small))

    # 2) Same tiny tensor forced through the Pallas single-DMA path.
    out_small_pl = jax.block_until_ready(
        noop_transformer_layer(hs_small, attention_mask, min_pallas_bytes=0))
    assert out_small_pl.shape == hs_small.shape
    assert out_small_pl.dtype == hs_small.dtype
    assert bool(jnp.array_equal(out_small_pl, hs_small))

    # 3) 4 MiB tensor: chunked HBM->HBM DMA path (8 concurrent descriptors).
    hs_big = jax.random.normal(k2, (512, 4, 512), dtype=jnp.float32)
    out_big = jax.block_until_ready(
        noop_transformer_layer(hs_big, attention_mask))
    assert out_big.shape == hs_big.shape
    assert out_big.dtype == hs_big.dtype
    assert bool(jnp.array_equal(out_big, hs_big))

    # 4) Uneven leading-dim split + bf16 dtype: chunked DMA with ragged chunks.
    hs_odd = jax.random.normal(k3, (301, 4, 512), dtype=jnp.float32).astype(
        jnp.bfloat16)
    out_odd = jax.block_until_ready(
        noop_transformer_layer(hs_odd, attention_mask, min_pallas_bytes=0))
    assert out_odd.shape == hs_odd.shape
    assert out_odd.dtype == hs_odd.dtype
    assert bool(jnp.array_equal(out_odd, hs_odd))

    print("KERNEL_OK")
</pallas_src>

<mosaic_0001>
module attributes {stable_mosaic.version = 11 : i64} {
  func.func @_single_dma_clone_kernel(%arg0: memref<8x2x32xf32, #tpu.memory_space<any>>, %arg1: memref<8x2x32xf32, #tpu.memory_space<any>>, %arg2: memref<!tpu.dma_semaphore, #tpu.memory_space<semaphore_mem>>) attributes {dimension_semantics = [], scalar_prefetch = 0 : i64, scratch_operands = 1 : i64, tpu.core_type = #tpu.core_type<tc>} {
    tpu.enqueue_dma source(%arg0 : memref<8x2x32xf32, #tpu.memory_space<any>>) target(%arg1 : memref<8x2x32xf32, #tpu.memory_space<any>>) target_semaphore(%arg2 : memref<!tpu.dma_semaphore, #tpu.memory_space<semaphore_mem>>)
    tpu.wait_dma2 semaphore(%arg2 : memref<!tpu.dma_semaphore, #tpu.memory_space<semaphore_mem>>) src(%arg0 : memref<8x2x32xf32, #tpu.memory_space<any>>) dst(%arg1 : memref<8x2x32xf32, #tpu.memory_space<any>>)
    return
  }
}

</mosaic_0001>

<llo_original>
// kernel: tpu_custom_call.1
$region0: #{tpu_custom_call.1}
  #allocation0 [shape = 'u32[]', space=smem, size = 0x4, offset = 0x4, fixed_abs, tag = 'smem constant byte address 0x4 - core index']
  #allocation1 [shape = 'u32[144,128]{1,0:T(1,128)}', space=vmem, size = 0x12000, scoped, tag = 'internal scratch']
  #allocation2 [shape = 's32[1]{0}', space=sflag, size = 0x4, scoped, tag = 'scratch operand']
  #allocation3 [shape = 's32[]', space=sflag, size = 0x4, offset = 0, fixed_abs, tag = 'sflag constant byte address 0x0 - dummy sync flag']
  #allocation4 [shape = 'u32[0]{0}', space=smem, size = 0, offset = 0, fixed_abs, tag = 'smem constant byte address 0x0 - null']
  %s0 = inlined_call_operand.hbm [shape: f32[8,2,32], index: 0, kind: input, shape index: {}]
  %s1 = inlined_call_operand.hbm [shape: f32[8,2,32], index: 1, kind: output, shape index: {}]
  %s2 = sld [smem:[#allocation0]]
  $region2: #{tpu_custom_call.1} parent=0
    _
  %s4 = ssub.s32 1, %s2
  %s5 = scalar_select 0, %s4, %s2
  %s7 = sshll.u32 1, 14
  %s8 = sxor.u32 4294967295, %s7
  %s11 = sshll.u32 3, 24
  %s12 = sxor.u32 4294967295, %s11
  %s13 = sand.u32 0, %s12
  %s15 = sor.u32 %s13, 0
  %18 = dma.general %s0, 256, %s1, [#allocation2], [#allocation3], [#allocation4], %s15, 0
  %s19 = smul.u32 8, 2
  %s20 = smul.u32 %s19, 1
  %s21 = sshll.u32 %s20, 4
  %22 = dma.done [#allocation2], %s21
  %23 = vsyncmov [#allocation2]
  %s24 = vpop.sfrf %23
  %p25 = scmp.eq.s32.totalorder %s24, 0
  %p26 = pneg %p25
  %28 = shalt.err (%p26)

</llo_original>
